<compile_context>
chip_gen: v7x
topology: tpu7x:2x2x1
jax: 0.10.0
libtpu: 0.0.40
codegen_flags: <defaults>
</compile_context>

<pallas_src>
import functools
import math

import jax
import jax.numpy as jnp
from jax import lax
from jax.experimental import pallas as pl
from jax.experimental.pallas import tpu as pltpu

# ----- SDE hyperparameters (Variance-Exploding forward SDE) -----
SIGMA_MIN = 0.05
SIGMA_MAX = 0.5
TIME_MIN = 1e-2
TIME_MAX = 1.0
NUM_STEPS = 10
DT_STEP = TIME_MAX / NUM_STEPS                       # sde.dt
LOG_RATIO = math.log(SIGMA_MAX / SIGMA_MIN)
SQRT_2LOGR = math.sqrt(2.0 * LOG_RATIO)
SQRT_DT = math.sqrt(DT_STEP)


def _choose_b_chunk(B, C, N, n_outputs):
    """Largest batch chunk that (a) keeps >=2 grid steps when B>=2 (v7x megacore),
    (b) keeps double-buffered blocks small vs. VMEM (sized for v7x's 64 MiB), and
    (c) divides B exactly (no ragged tail blocks)."""
    bytes_per_b = (2 + n_outputs) * C * N * 4          # state + noise + outputs, f32
    budget = 8 << 20                                   # ~8 MiB of blocks/step (x2 double-buffer)
    max_by_vmem = max(1, budget // max(bytes_per_b, 1))
    max_by_cores = max(1, -(-B // 2)) if B >= 2 else 1  # ceil(B/2) -> >=2 grid steps
    b_chunk = int(min(B, max_by_vmem, max_by_cores))
    while B % b_chunk:
        b_chunk -= 1
    return b_chunk


def _make_kernel(b_chunk, T, N, pow2_T, compute_mean):
    """Build the kernel closure for a given chunking / shape configuration."""

    def kernel(len_sref, fd_sref, fdsq_sref, *refs):
        # --- unpack refs (inputs then outputs) ---
        if pow2_T:
            state_ref, noise_ref, bias_ref, w1_ref, w2_ref = refs[:5]
            out_refs = refs[5:]
            # T index per lane of the flattened D*T axis, built in-kernel (no DMA).
            tpos = lax.broadcasted_iota(jnp.int32, (1, N), 1) & (T - 1)
        else:
            tidx_ref = refs[0]
            state_ref, noise_ref, bias_ref, w1_ref, w2_ref = refs[1:6]
            out_refs = refs[6:]
            tpos = tidx_ref[...]
        new_state_ref = out_refs[0]
        mean_ref = out_refs[1] if compute_mean else None

        b0 = pl.program_id(0) * b_chunk                # first global batch index of this chunk
        w1 = w1_ref[...]                               # (H, C)  -- hoisted out of the chunk loop
        w2 = w2_ref[...]                               # (C, H)

        # Small, fully unrolled loop over the batch elements of this chunk (b_chunk is tiny).
        for bb in range(b_chunk):
            g = b0 + bb                                # global batch index (dynamic)
            x = state_ref[bb]                          # (C, N) with N = D*T

            # ---- score estimator: time-conditioned channel MLP (1x1 conv) on the MXU ----
            h = jnp.tanh(jnp.dot(w1, x, preferred_element_type=jnp.float32)
                         + bias_ref[bb])               # (H, N), per-batch bias (H,1) broadcasts
            score = jnp.dot(w2, h, preferred_element_type=jnp.float32)   # (C, N)

            # ---- sequence mask along T from the prefetched length scalar ----
            mask = (tpos < len_sref[g]).astype(jnp.float32)              # (1, N)

            # ---- Euler–Maruyama predictor update with scalar SDE coefficients ----
            # reverse drift = -fwd_diff^2 * score (VE forward drift is 0), masked;
            # diffusion = fwd_diff, masked.
            fdsq_m = fdsq_sref[g] * mask               # masked fwd_diff^2, (1, N)
            fd_m = fd_sref[g] * mask                   # masked fwd_diff,   (1, N)

            mean = x + fdsq_m * score                  # state_mean = state - drift
            new_state = mean + fd_m * noise_ref[bb]

            new_state_ref[bb] = new_state
            if compute_mean:
                mean_ref[bb] = mean

    return kernel


def predictor_step(state, time, noise, state_length, w1, b1, tw, w2,
                   *, compute_mean=True, b_chunk=None):
    """state/noise: (B, C, D, T) f32; time: (B,) f32; state_length: (B,) i32.

    Returns (new_state, state_mean) like the PyTorch Predictor; state_mean is None
    when compute_mean=False (saves one full-size HBM output).
    """
    B, C, D, T = state.shape
    N = D * T
    H = w1.shape[0]

    x = state.reshape(B, C, N)
    z = noise.reshape(B, C, N)
    time = time.astype(jnp.float32)

    # Per-batch scalar SDE coefficients (forward VE-SDE, discretized) — computed once here,
    # prefetched into SMEM, used as scalar multipliers inside the kernel.
    g_t = SIGMA_MIN * jnp.exp(time * LOG_RATIO) * SQRT_2LOGR               # (B,)
    fwd_diff = g_t * SQRT_DT                                               # (B,)
    fwd_diff_sq = fwd_diff * fwd_diff                                      # (B,)

    # Per-batch time-conditioned bias of the score MLP (hoisted out of the kernel).
    bias = b1[None, :, :] + tw[None, :, :] * time[:, None, None]           # (B, H, 1)

    n_outputs = 2 if compute_mean else 1
    if b_chunk is None:
        b_chunk = _choose_b_chunk(B, C, N, n_outputs)
    grid = (B // b_chunk,)

    pow2_T = (T & (T - 1)) == 0
    kernel = _make_kernel(b_chunk, T, N, pow2_T, compute_mean)

    in_specs = []
    inputs = []
    if not pow2_T:
        # Fallback only: non-pow2 T needs a precomputed T-index table (int mod is not a
        # safe Mosaic vector op). Constant block index -> fetched once, then revisit-cached.
        t_index = jnp.tile(jnp.arange(T, dtype=jnp.int32), D).reshape(1, N)
        in_specs.append(pl.BlockSpec((1, N), lambda b, *p: (0, 0)))
        inputs.append(t_index)
    in_specs += [
        pl.BlockSpec((b_chunk, C, N), lambda b, *p: (b, 0, 0)),   # state chunk
        pl.BlockSpec((b_chunk, C, N), lambda b, *p: (b, 0, 0)),   # noise chunk
        pl.BlockSpec((b_chunk, H, 1), lambda b, *p: (b, 0, 0)),   # per-batch bias chunk
        pl.BlockSpec((H, C), lambda b, *p: (0, 0)),               # W1 (shared)
        pl.BlockSpec((C, H), lambda b, *p: (0, 0)),               # W2 (shared)
    ]
    inputs += [x, z, bias, w1, w2]

    if compute_mean:
        out_specs = [pl.BlockSpec((b_chunk, C, N), lambda b, *p: (b, 0, 0)),
                     pl.BlockSpec((b_chunk, C, N), lambda b, *p: (b, 0, 0))]
        out_shape = (jax.ShapeDtypeStruct((B, C, N), jnp.float32),
                     jax.ShapeDtypeStruct((B, C, N), jnp.float32))
    else:
        out_specs = [pl.BlockSpec((b_chunk, C, N), lambda b, *p: (b, 0, 0))]
        out_shape = (jax.ShapeDtypeStruct((B, C, N), jnp.float32),)

    grid_spec = pltpu.PrefetchScalarGridSpec(
        num_scalar_prefetch=3,
        grid=grid,
        in_specs=in_specs,
        out_specs=out_specs,
    )

    # NOTE: blocks are sized by _choose_b_chunk to stay well under the scoped-VMEM default
    # on all generations (incl. v7x's smaller VMEM); raise vmem_limit_bytes here only for
    # very large D*T, or lower the budget in _choose_b_chunk.
    outs = pl.pallas_call(
        kernel,
        out_shape=out_shape,
        grid_spec=grid_spec,
        compiler_params=pltpu.CompilerParams(dimension_semantics=("parallel",)),
    )(state_length.astype(jnp.int32), fwd_diff, fwd_diff_sq, *inputs)

    if compute_mean:
        new_state, mean = outs
        return new_state.reshape(B, C, D, T), mean.reshape(B, C, D, T)
    (new_state,) = outs
    return new_state.reshape(B, C, D, T), None


def predictor_reference(state, time, noise, state_length, w1, b1, tw, w2):
    """Pure-JAX reference of the same forward pass (for verification)."""
    B, C, D, T = state.shape
    N = D * T
    x = state.reshape(B, C, N)
    h = jnp.tanh(jnp.einsum('hc,bcn->bhn', w1, x) + b1[None] + tw[None] * time[:, None, None])
    score = jnp.einsum('ch,bhn->bcn', w2, h)
    g_t = SIGMA_MIN * jnp.exp(time * LOG_RATIO) * SQRT_2LOGR
    fwd_diff = (g_t * SQRT_DT)[:, None, None]
    drift = -(fwd_diff ** 2) * score
    t_mask = (jnp.arange(T)[None, :] < state_length[:, None]).astype(jnp.float32)
    mask = jnp.broadcast_to(t_mask[:, None, None, :], (B, 1, D, T)).reshape(B, 1, N)
    drift = drift * mask
    diff_m = fwd_diff * mask
    mean = x - drift
    new_state = mean + diff_m * noise.reshape(B, C, N)
    return new_state.reshape(B, C, D, T), mean.reshape(B, C, D, T)


if __name__ == "__main__":
    # B=4 so batch folding is exercised (b_chunk=2 -> 2 grid steps of 2 batch elements).
    B, C, D, T, H = 4, 4, 16, 16, 32

    key = jax.random.PRNGKey(0)
    k_state, k_noise, k_time, k_w1, k_b1, k_tw, k_w2 = jax.random.split(key, 7)

    state = jax.random.normal(k_state, (B, C, D, T), dtype=jnp.float32)
    noise = jax.random.normal(k_noise, (B, C, D, T), dtype=jnp.float32)      # z ~ N(0, I)
    time = jax.random.uniform(k_time, (B,), dtype=jnp.float32) * (TIME_MAX - TIME_MIN) + TIME_MIN
    state_length = jnp.array([T, T // 2, T - 3, 1], dtype=jnp.int32)

    # deterministic synthetic score-estimator parameters
    # TODO(synk): the real NCSN++ score estimator has no compact Pallas equivalent here;
    # it is stood in for by this time-conditioned 2-layer channel MLP (1x1-conv equivalent).
    w1 = 0.1 * jax.random.normal(k_w1, (H, C), dtype=jnp.float32)
    b1 = 0.1 * jax.random.normal(k_b1, (H, 1), dtype=jnp.float32)
    tw = 0.1 * jax.random.normal(k_tw, (H, 1), dtype=jnp.float32)
    w2 = 0.1 * jax.random.normal(k_w2, (C, H), dtype=jnp.float32)

    # Full variant (matches the PyTorch Predictor: returns new_state and state_mean).
    new_state, state_mean = predictor_step(state, time, noise, state_length, w1, b1, tw, w2)
    jax.block_until_ready((new_state, state_mean))

    ref_new, ref_mean = predictor_reference(state, time, noise, state_length, w1, b1, tw, w2)
    assert jnp.allclose(new_state, ref_new, atol=1e-5, rtol=1e-5)
    assert jnp.allclose(state_mean, ref_mean, atol=1e-5, rtol=1e-5)

    # Reduced-traffic variant (drops the state_mean output; ~25% less HBM traffic).
    new_state_only, none_mean = predictor_step(state, time, noise, state_length,
                                               w1, b1, tw, w2, compute_mean=False)
    jax.block_until_ready(new_state_only)
    assert none_mean is None
    assert jnp.allclose(new_state_only, ref_new, atol=1e-5, rtol=1e-5)

    print("KERNEL_OK")
</pallas_src>

<mosaic_0001>
module attributes {stable_mosaic.version = 11 : i64} {
  func.func @kernel(%arg0: i32, %arg1: memref<4xi32, #tpu.memory_space<smem>>, %arg2: memref<4xf32, #tpu.memory_space<smem>>, %arg3: memref<4xf32, #tpu.memory_space<smem>>, %arg4: memref<2x4x256xf32, #tpu.memory_space<vmem>>, %arg5: memref<2x4x256xf32, #tpu.memory_space<vmem>>, %arg6: memref<2x32x1xf32, #tpu.memory_space<vmem>>, %arg7: memref<32x4xf32, #tpu.memory_space<vmem>>, %arg8: memref<4x32xf32, #tpu.memory_space<vmem>>, %arg9: memref<2x4x256xf32, #tpu.memory_space<vmem>>, %arg10: memref<2x4x256xf32, #tpu.memory_space<vmem>>) attributes {dimension_semantics = [#tpu.dimension_semantics<parallel>], iteration_bounds = array<i64: 2>, scalar_prefetch = 3 : i64, scratch_operands = 0 : i64, tpu.core_type = #tpu.core_type<tc>, window_params = [{transform_indices = @transform_0, window_bounds = array<i64: 2, 4, 256>}, {transform_indices = @transform_1, window_bounds = array<i64: 2, 4, 256>}, {transform_indices = @transform_2, window_bounds = array<i64: 2, 32, 1>}, {pipeline_mode = #tpu.pipeline_mode<synchronous>, transform_indices = @transform_3, window_bounds = array<i64: 32, 4>}, {pipeline_mode = #tpu.pipeline_mode<synchronous>, transform_indices = @transform_4, window_bounds = array<i64: 4, 32>}, {transform_indices = @transform_5, window_bounds = array<i64: 2, 4, 256>}, {transform_indices = @transform_6, window_bounds = array<i64: 2, 4, 256>}]} {
    %0 = tpu.iota {dimensions = array<i32: 1>} : vector<1x256xi32>
    %c15_i32 = arith.constant 15 : i32
    %1 = vector.broadcast %c15_i32 : i32 to vector<1x256xi32>
    %2 = arith.andi %0, %1 : vector<1x256xi32>
    %c2_i32 = arith.constant 2 : i32
    %3 = arith.muli %arg0, %c2_i32 : i32
    %c0 = arith.constant 0 : index
    %c0_0 = arith.constant 0 : index
    %4 = vector.load %arg7[%c0, %c0_0] : memref<32x4xf32, #tpu.memory_space<vmem>>, vector<32x4xf32>
    %c0_1 = arith.constant 0 : index
    %c0_2 = arith.constant 0 : index
    %5 = vector.load %arg8[%c0_1, %c0_2] : memref<4x32xf32, #tpu.memory_space<vmem>>, vector<4x32xf32>
    %c0_i32 = arith.constant 0 : i32
    %6 = arith.addi %3, %c0_i32 : i32
    %c0_3 = arith.constant 0 : index
    %c0_4 = arith.constant 0 : index
    %c0_5 = arith.constant 0 : index
    %7 = vector.load %arg4[%c0_3, %c0_4, %c0_5] : memref<2x4x256xf32, #tpu.memory_space<vmem>>, vector<1x4x256xf32>
    %8 = vector.shape_cast %7 : vector<1x4x256xf32> to vector<4x256xf32>
    %cst = arith.constant dense<0.000000e+00> : vector<32x256xf32>
    %9 = tpu.matmul %4, %8, %cst {dimension_numbers = #tpu.dot_dimension_numbers<[1], [0], [0], [1], [0, 0, 1, 1], [], []>} : vector<32x4xf32>, vector<4x256xf32>, vector<32x256xf32> -> vector<32x256xf32>
    %c0_6 = arith.constant 0 : index
    %c0_7 = arith.constant 0 : index
    %c0_8 = arith.constant 0 : index
    %10 = vector.load %arg6[%c0_6, %c0_7, %c0_8] : memref<2x32x1xf32, #tpu.memory_space<vmem>>, vector<1x32x1xf32>
    %11 = vector.shape_cast %10 : vector<1x32x1xf32> to vector<32x1xf32>
    %12 = vector.broadcast %11 : vector<32x1xf32> to vector<32x256xf32>
    %13 = arith.addf %9, %12 : vector<32x256xf32>
    %14 = math.tanh %13 : vector<32x256xf32>
    %cst_9 = arith.constant dense<0.000000e+00> : vector<4x256xf32>
    %15 = tpu.matmul %5, %14, %cst_9 {dimension_numbers = #tpu.dot_dimension_numbers<[1], [0], [0], [1], [0, 0, 1, 1], [], []>} : vector<4x32xf32>, vector<32x256xf32>, vector<4x256xf32> -> vector<4x256xf32>
    %16 = arith.index_cast %6 : i32 to index
    %17 = memref.load %arg1[%16] : memref<4xi32, #tpu.memory_space<smem>>
    %18 = vector.broadcast %17 : i32 to vector<1x256xi32>
    %19 = arith.cmpi slt, %2, %18 : vector<1x256xi32>
    %20 = arith.extui %19 : vector<1x256xi1> to vector<1x256xi32>
    %21 = arith.sitofp %20 : vector<1x256xi32> to vector<1x256xf32>
    %22 = arith.index_cast %6 : i32 to index
    %23 = memref.load %arg3[%22] : memref<4xf32, #tpu.memory_space<smem>>
    %24 = vector.broadcast %23 : f32 to vector<1x256xf32>
    %25 = arith.mulf %24, %21 : vector<1x256xf32>
    %26 = arith.index_cast %6 : i32 to index
    %27 = memref.load %arg2[%26] : memref<4xf32, #tpu.memory_space<smem>>
    %28 = vector.broadcast %27 : f32 to vector<1x256xf32>
    %29 = arith.mulf %28, %21 : vector<1x256xf32>
    %30 = vector.broadcast %25 : vector<1x256xf32> to vector<4x256xf32>
    %31 = arith.mulf %30, %15 : vector<4x256xf32>
    %32 = arith.addf %8, %31 : vector<4x256xf32>
    %c0_10 = arith.constant 0 : index
    %c0_11 = arith.constant 0 : index
    %c0_12 = arith.constant 0 : index
    %33 = vector.load %arg5[%c0_10, %c0_11, %c0_12] : memref<2x4x256xf32, #tpu.memory_space<vmem>>, vector<1x4x256xf32>
    %34 = vector.shape_cast %33 : vector<1x4x256xf32> to vector<4x256xf32>
    %35 = vector.broadcast %29 : vector<1x256xf32> to vector<4x256xf32>
    %36 = arith.mulf %35, %34 : vector<4x256xf32>
    %37 = arith.addf %32, %36 : vector<4x256xf32>
    %c0_13 = arith.constant 0 : index
    %c0_14 = arith.constant 0 : index
    %c0_15 = arith.constant 0 : index
    %38 = vector.load %arg9[%c0_13, %c0_14, %c0_15] : memref<2x4x256xf32, #tpu.memory_space<vmem>>, vector<1x4x256xf32>
    %39 = vector.shape_cast %38 : vector<1x4x256xf32> to vector<4x256xf32>
    %40 = vector.shape_cast %37 : vector<4x256xf32> to vector<1x4x256xf32>
    tpu.vector_store %arg9[%c0_13, %c0_14, %c0_15], %40 {strides = array<i32>} : memref<2x4x256xf32, #tpu.memory_space<vmem>>, vector<1x4x256xf32>,
    %c0_16 = arith.constant 0 : index
    %c0_17 = arith.constant 0 : index
    %c0_18 = arith.constant 0 : index
    %41 = vector.load %arg10[%c0_16, %c0_17, %c0_18] : memref<2x4x256xf32, #tpu.memory_space<vmem>>, vector<1x4x256xf32>
    %42 = vector.shape_cast %41 : vector<1x4x256xf32> to vector<4x256xf32>
    %43 = vector.shape_cast %32 : vector<4x256xf32> to vector<1x4x256xf32>
    tpu.vector_store %arg10[%c0_16, %c0_17, %c0_18], %43 {strides = array<i32>} : memref<2x4x256xf32, #tpu.memory_space<vmem>>, vector<1x4x256xf32>,
    %c1_i32 = arith.constant 1 : i32
    %44 = arith.addi %3, %c1_i32 : i32
    %c1 = arith.constant 1 : index
    %c0_19 = arith.constant 0 : index
    %c0_20 = arith.constant 0 : index
    %45 = vector.load %arg4[%c1, %c0_19, %c0_20] : memref<2x4x256xf32, #tpu.memory_space<vmem>>, vector<1x4x256xf32>
    %46 = vector.shape_cast %45 : vector<1x4x256xf32> to vector<4x256xf32>
    %cst_21 = arith.constant dense<0.000000e+00> : vector<32x256xf32>
    %47 = tpu.matmul %4, %46, %cst_21 {dimension_numbers = #tpu.dot_dimension_numbers<[1], [0], [0], [1], [0, 0, 1, 1], [], []>} : vector<32x4xf32>, vector<4x256xf32>, vector<32x256xf32> -> vector<32x256xf32>
    %c1_22 = arith.constant 1 : index
    %c0_23 = arith.constant 0 : index
    %c0_24 = arith.constant 0 : index
    %48 = vector.load %arg6[%c1_22, %c0_23, %c0_24] : memref<2x32x1xf32, #tpu.memory_space<vmem>>, vector<1x32x1xf32>
    %49 = vector.shape_cast %48 : vector<1x32x1xf32> to vector<32x1xf32>
    %50 = vector.broadcast %49 : vector<32x1xf32> to vector<32x256xf32>
    %51 = arith.addf %47, %50 : vector<32x256xf32>
    %52 = math.tanh %51 : vector<32x256xf32>
    %cst_25 = arith.constant dense<0.000000e+00> : vector<4x256xf32>
    %53 = tpu.matmul %5, %52, %cst_25 {dimension_numbers = #tpu.dot_dimension_numbers<[1], [0], [0], [1], [0, 0, 1, 1], [], []>} : vector<4x32xf32>, vector<32x256xf32>, vector<4x256xf32> -> vector<4x256xf32>
    %54 = arith.index_cast %44 : i32 to index
    %55 = memref.load %arg1[%54] : memref<4xi32, #tpu.memory_space<smem>>
    %56 = vector.broadcast %55 : i32 to vector<1x256xi32>
    %57 = arith.cmpi slt, %2, %56 : vector<1x256xi32>
    %58 = arith.extui %57 : vector<1x256xi1> to vector<1x256xi32>
    %59 = arith.sitofp %58 : vector<1x256xi32> to vector<1x256xf32>
    %60 = arith.index_cast %44 : i32 to index
    %61 = memref.load %arg3[%60] : memref<4xf32, #tpu.memory_space<smem>>
    %62 = vector.broadcast %61 : f32 to vector<1x256xf32>
    %63 = arith.mulf %62, %59 : vector<1x256xf32>
    %64 = arith.index_cast %44 : i32 to index
    %65 = memref.load %arg2[%64] : memref<4xf32, #tpu.memory_space<smem>>
    %66 = vector.broadcast %65 : f32 to vector<1x256xf32>
    %67 = arith.mulf %66, %59 : vector<1x256xf32>
    %68 = vector.broadcast %63 : vector<1x256xf32> to vector<4x256xf32>
    %69 = arith.mulf %68, %53 : vector<4x256xf32>
    %70 = arith.addf %46, %69 : vector<4x256xf32>
    %c1_26 = arith.constant 1 : index
    %c0_27 = arith.constant 0 : index
    %c0_28 = arith.constant 0 : index
    %71 = vector.load %arg5[%c1_26, %c0_27, %c0_28] : memref<2x4x256xf32, #tpu.memory_space<vmem>>, vector<1x4x256xf32>
    %72 = vector.shape_cast %71 : vector<1x4x256xf32> to vector<4x256xf32>
    %73 = vector.broadcast %67 : vector<1x256xf32> to vector<4x256xf32>
    %74 = arith.mulf %73, %72 : vector<4x256xf32>
    %75 = arith.addf %70, %74 : vector<4x256xf32>
    %c1_29 = arith.constant 1 : index
    %c0_30 = arith.constant 0 : index
    %c0_31 = arith.constant 0 : index
    %76 = vector.load %arg9[%c1_29, %c0_30, %c0_31] : memref<2x4x256xf32, #tpu.memory_space<vmem>>, vector<1x4x256xf32>
    %77 = vector.shape_cast %76 : vector<1x4x256xf32> to vector<4x256xf32>
    %78 = vector.shape_cast %75 : vector<4x256xf32> to vector<1x4x256xf32>
    tpu.vector_store %arg9[%c1_29, %c0_30, %c0_31], %78 {strides = array<i32>} : memref<2x4x256xf32, #tpu.memory_space<vmem>>, vector<1x4x256xf32>,
    %c1_32 = arith.constant 1 : index
    %c0_33 = arith.constant 0 : index
    %c0_34 = arith.constant 0 : index
    %79 = vector.load %arg10[%c1_32, %c0_33, %c0_34] : memref<2x4x256xf32, #tpu.memory_space<vmem>>, vector<1x4x256xf32>
    %80 = vector.shape_cast %79 : vector<1x4x256xf32> to vector<4x256xf32>
    %81 = vector.shape_cast %70 : vector<4x256xf32> to vector<1x4x256xf32>
    tpu.vector_store %arg10[%c1_32, %c0_33, %c0_34], %81 {strides = array<i32>} : memref<2x4x256xf32, #tpu.memory_space<vmem>>, vector<1x4x256xf32>,
    return
  }
  func.func @transform_0(%arg0: i32, %arg1: memref<4xi32, #tpu.memory_space<smem>>, %arg2: memref<4xf32, #tpu.memory_space<smem>>, %arg3: memref<4xf32, #tpu.memory_space<smem>>) -> (i32, i32, i32) {
    %c0_i32 = arith.constant 0 : i32
    %c0_i32_0 = arith.constant 0 : i32
    %c0_i32_1 = arith.constant 0 : i32
    return %arg0, %c0_i32, %c0_i32_0 : i32, i32, i32
  }
  func.func @transform_1(%arg0: i32, %arg1: memref<4xi32, #tpu.memory_space<smem>>, %arg2: memref<4xf32, #tpu.memory_space<smem>>, %arg3: memref<4xf32, #tpu.memory_space<smem>>) -> (i32, i32, i32) {
    %c0_i32 = arith.constant 0 : i32
    %c0_i32_0 = arith.constant 0 : i32
    %c0_i32_1 = arith.constant 0 : i32
    return %arg0, %c0_i32, %c0_i32_0 : i32, i32, i32
  }
  func.func @transform_2(%arg0: i32, %arg1: memref<4xi32, #tpu.memory_space<smem>>, %arg2: memref<4xf32, #tpu.memory_space<smem>>, %arg3: memref<4xf32, #tpu.memory_space<smem>>) -> (i32, i32, i32) {
    %c0_i32 = arith.constant 0 : i32
    %c0_i32_0 = arith.constant 0 : i32
    %c0_i32_1 = arith.constant 0 : i32
    return %arg0, %c0_i32, %c0_i32_0 : i32, i32, i32
  }
  func.func @transform_3(%arg0: i32, %arg1: memref<4xi32, #tpu.memory_space<smem>>, %arg2: memref<4xf32, #tpu.memory_space<smem>>, %arg3: memref<4xf32, #tpu.memory_space<smem>>) -> (i32, i32) {
    %c0_i32 = arith.constant 0 : i32
    %c0_i32_0 = arith.constant 0 : i32
    %c0_i32_1 = arith.constant 0 : i32
    return %c0_i32, %c0_i32_0 : i32, i32
  }
  func.func @transform_4(%arg0: i32, %arg1: memref<4xi32, #tpu.memory_space<smem>>, %arg2: memref<4xf32, #tpu.memory_space<smem>>, %arg3: memref<4xf32, #tpu.memory_space<smem>>) -> (i32, i32) {
    %c0_i32 = arith.constant 0 : i32
    %c0_i32_0 = arith.constant 0 : i32
    %c0_i32_1 = arith.constant 0 : i32
    return %c0_i32, %c0_i32_0 : i32, i32
  }
  func.func @transform_5(%arg0: i32, %arg1: memref<4xi32, #tpu.memory_space<smem>>, %arg2: memref<4xf32, #tpu.memory_space<smem>>, %arg3: memref<4xf32, #tpu.memory_space<smem>>) -> (i32, i32, i32) {
    %c0_i32 = arith.constant 0 : i32
    %c0_i32_0 = arith.constant 0 : i32
    %c0_i32_1 = arith.constant 0 : i32
    return %arg0, %c0_i32, %c0_i32_0 : i32, i32, i32
  }
  func.func @transform_6(%arg0: i32, %arg1: memref<4xi32, #tpu.memory_space<smem>>, %arg2: memref<4xf32, #tpu.memory_space<smem>>, %arg3: memref<4xf32, #tpu.memory_space<smem>>) -> (i32, i32, i32) {
    %c0_i32 = arith.constant 0 : i32
    %c0_i32_0 = arith.constant 0 : i32
    %c0_i32_1 = arith.constant 0 : i32
    return %arg0, %c0_i32, %c0_i32_0 : i32, i32, i32
  }
}

</mosaic_0001>

<llo_original>
// kernel: tpu_custom_call.1
$region0: #{tpu_custom_call.1}
  #allocation0 [shape = 'u32[]', space=smem, size = 0x4, offset = 0x4, fixed_abs, tag = 'smem constant byte address 0x4 - core index']
  #allocation1 [shape = 'u32[144,128]{1,0:T(1,128)}', space=vmem, size = 0x12000, scoped, tag = 'internal scratch']
  #allocation2 [shape = 's32[1]{0}', space=sflag, size = 0x4, scoped, tag = 'scoped memory for tpu_custom_call.1']
  #allocation3 [shape = 'u8[512]{0}', space=smem, size = 0x200, scoped, tag = 'prefetched SMEM operand 0']
  #allocation4 [shape = 'u8[512]{0}', space=smem, size = 0x200, scoped, tag = 'prefetched SMEM operand 1']
  #allocation5 [shape = 'u8[512]{0}', space=smem, size = 0x200, scoped, tag = 'prefetched SMEM operand 2']
  %s0 = inlined_call_operand.vmem [shape: s32[4], index: 0, kind: input, shape index: {}]
  %s1 = inlined_call_operand.vmem [shape: f32[4], index: 1, kind: input, shape index: {}]
  %s2 = inlined_call_operand.vmem [shape: f32[4], index: 2, kind: input, shape index: {}]
  %s3 = inlined_call_operand.vmem [shape: f32[4,4,256], index: 3, kind: input, shape index: {}]
  %s4 = inlined_call_operand.vmem [shape: f32[4,4,256], index: 4, kind: input, shape index: {}]
  %s5 = inlined_call_operand.vmem [shape: f32[4,32,1], index: 5, kind: input, shape index: {}]
  %s6 = inlined_call_operand.vmem [shape: f32[32,4], index: 6, kind: input, shape index: {}]
  %s7 = inlined_call_operand.vmem [shape: f32[4,32], index: 7, kind: input, shape index: {}]
  %s8 = inlined_call_operand.hbm [shape: f32[4,4,256], index: 8, kind: output, shape index: {0}]
  %s9 = inlined_call_operand.hbm [shape: f32[4,4,256], index: 9, kind: output, shape index: {1}]
  %10 = xla_tuple %s8, %s9
  %s11 = sld [smem:[#allocation0]]
  $region61: #{tpu_custom_call.1} parent=0
    _
  %s13 = ssub.s32 1, %s11
  %s14 = scalar_select 0, %s13, %s11
  %s15 = sshll.u32 %s0, 4
  %s16 = int_to_ptr.vmem [resolvable:$true] %s15
  %18 = dma.vmem_to_smem %s16, 16, [#allocation3], [#allocation2]
  %s19 = sshll.u32 %s1, 4
  %s20 = int_to_ptr.vmem [resolvable:$true] %s19
  %22 = dma.vmem_to_smem %s20, 16, [#allocation4], [#allocation2]
  %s23 = sshll.u32 %s2, 4
  %s24 = int_to_ptr.vmem [resolvable:$true] %s23
  %26 = dma.vmem_to_smem %s24, 16, [#allocation5], [#allocation2]
  %27 = dma.done [#allocation2], 48
  %28 = sfence
  $region1: #{tpu_custom_call.1} parent=0
    #allocation6 [shape = 'u8[16384]{0}', space=vmem, size = 0x4000, scoped, tag = 'output window, operand 0']
    #allocation7 [shape = 's32[2]{0}', space=sflag, size = 0x8, scoped, tag = 'scoped memory for tpu_custom_call.1']
    #allocation8 [shape = 'u8[16384]{0}', space=vmem, size = 0x4000, scoped, tag = 'output window, operand 1']
    #allocation9 [shape = 's32[2]{0}', space=sflag, size = 0x8, scoped, tag = 'scoped memory for tpu_custom_call.1']
    %29 = vsyncpa [#allocation7], 0
    %s30 = scalar_lea.sflag [#allocation7], 1
    %31 = vsyncpa %s30, 0
    %32 = vsyncpa [#allocation9], 0
    %s33 = scalar_lea.sflag [#allocation9], 1
    %34 = vsyncpa %s33, 0
    loop: start=0, step=1, limit=4
    $region2: #{tpu_custom_call.1} parent=1 // loop_pre_header
      _
    $region3: #{tpu_custom_call.1} parent=1 // loop_header
      %s36 = sphi 0, %s40
      %p37 = scmp.ge.s32.totalorder %s36, 4
      %s46 = sphi 0, %s48
      %s49 = sphi 0, %s46
      %s50 = sphi 0, %s49
      %s66 = sphi 0, %s50
      %s72 = sphi 0, %s74
      %s75 = sphi 0, %s72
      %s76 = sphi 0, %s75
      %s92 = sphi 0, %s76
      %s98 = sphi 0, %s100
      %s101 = sphi 0, %s98
      %s102 = sphi 0, %s101
      %s118 = sphi 0, %s102
      %s122 = sphi 0, %s122
      %s124 = sphi 0, %s122
      %s125 = sphi 0, %s124
      %s139 = sphi 0, %s125
      %s143 = sphi 0, %s143
      %s145 = sphi 0, %s143
      %s146 = sphi 0, %s145
      %s160 = sphi 0, %s146
      %s166 = sphi 0, %s168
      %s169 = sphi 0, %s166
      %s170 = sphi 0, %s169
      %s186 = sphi 0, %s170
      %s192 = sphi 0, %s194
      %s195 = sphi 0, %s192
      %s196 = sphi 0, %s195
      %s212 = sphi 0, %s196
    $region4: #{tpu_custom_call.1} parent=1 // loop_header_branch
      %39 = sbr.rel (%p37) target = $region8
    $region5: #{tpu_custom_call.1} parent=1 // loop_body
      %s41 = ssub.s32 %s36, 1
      %s42 = ssub.s32 %s36, 2
      %s43 = sadd.s32 %s36, 1
      %s44 = ssub.s32 %s36, %s43
      %p45 = scmp.eq.s32.totalorder %s44, 0
      %s47 = sadd.s32 %s46, 1
      %s48 = scalar_select %p45, %s46, %s47
      %p51 = pneg %p45
      %p52 = scmp.eq.s32.totalorder %s36, 1
      %p53 = por %p51, %p52
      %p54 = scmp.ne.s32.totalorder %s46, %s49
      %p55 = scmp.eq.s32.totalorder %s36, 0
      %p56 = por %p54, %p55
      %p57 = scmp.ne.s32.totalorder %s46, %s49
      %p58 = scmp.eq.s32.totalorder %s41, 1
      %p59 = por %p57, %p58
      %p60 = scmp.ne.s32.totalorder %s49, %s50
      %p61 = scmp.eq.s32.totalorder %s41, 0
      %p62 = por %p60, %p61
      %p63 = scmp.ne.s32.totalorder %s49, %s50
      %p64 = scmp.eq.s32.totalorder %s42, 1
      %p65 = por %p63, %p64
      %p67 = scmp.ne.s32.totalorder %s50, %s66
      %p68 = scmp.eq.s32.totalorder %s42, 0
      %p69 = por %p67, %p68
      %s70 = ssub.s32 %s36, %s43
      %p71 = scmp.eq.s32.totalorder %s70, 0
      %s73 = sadd.s32 %s72, 1
      %s74 = scalar_select %p71, %s72, %s73
      %p77 = pneg %p71
      %p78 = scmp.eq.s32.totalorder %s36, 1
      %p79 = por %p77, %p78
      %p80 = scmp.ne.s32.totalorder %s72, %s75
      %p81 = scmp.eq.s32.totalorder %s36, 0
      %p82 = por %p80, %p81
      %p83 = scmp.ne.s32.totalorder %s72, %s75
      %p84 = scmp.eq.s32.totalorder %s41, 1
      %p85 = por %p83, %p84
      %p86 = scmp.ne.s32.totalorder %s75, %s76
      %p87 = scmp.eq.s32.totalorder %s41, 0
      %p88 = por %p86, %p87
      %p89 = scmp.ne.s32.totalorder %s75, %s76
      %p90 = scmp.eq.s32.totalorder %s42, 1
      %p91 = por %p89, %p90
      %p93 = scmp.ne.s32.totalorder %s76, %s92
      %p94 = scmp.eq.s32.totalorder %s42, 0
      %p95 = por %p93, %p94
      %s96 = ssub.s32 %s36, %s43
      %p97 = scmp.eq.s32.totalorder %s96, 0
      %s99 = sadd.s32 %s98, 1
      %s100 = scalar_select %p97, %s98, %s99
      %p103 = pneg %p97
      %p104 = scmp.eq.s32.totalorder %s36, 1
      %p105 = por %p103, %p104
      %p106 = scmp.ne.s32.totalorder %s98, %s101
      %p107 = scmp.eq.s32.totalorder %s36, 0
      %p108 = por %p106, %p107
      %p109 = scmp.ne.s32.totalorder %s98, %s101
      %p110 = scmp.eq.s32.totalorder %s41, 1
      %p111 = por %p109, %p110
      %p112 = scmp.ne.s32.totalorder %s101, %s102
      %p113 = scmp.eq.s32.totalorder %s41, 0
      %p114 = por %p112, %p113
      %p115 = scmp.ne.s32.totalorder %s101, %s102
      %p116 = scmp.eq.s32.totalorder %s42, 1
      %p117 = por %p115, %p116
      %p119 = scmp.ne.s32.totalorder %s102, %s118
      %p120 = scmp.eq.s32.totalorder %s42, 0
      %p121 = por %p119, %p120
      %s123 = sadd.s32 %s122, 1
      %p126 = scmp.eq.s32.totalorder %s36, 1
      %p127 = scmp.ne.s32.totalorder %s122, %s124
      %p128 = scmp.eq.s32.totalorder %s36, 0
      %p129 = por %p127, %p128
      %p130 = scmp.ne.s32.totalorder %s122, %s124
      %p131 = scmp.eq.s32.totalorder %s41, 1
      %p132 = por %p130, %p131
      %p133 = scmp.ne.s32.totalorder %s124, %s125
      %p134 = scmp.eq.s32.totalorder %s41, 0
      %p135 = por %p133, %p134
      %p136 = scmp.ne.s32.totalorder %s124, %s125
      %p137 = scmp.eq.s32.totalorder %s42, 1
      %p138 = por %p136, %p137
      %p140 = scmp.ne.s32.totalorder %s125, %s139
      %p141 = scmp.eq.s32.totalorder %s42, 0
      %p142 = por %p140, %p141
      %s144 = sadd.s32 %s143, 1
      %p147 = scmp.eq.s32.totalorder %s36, 1
      %p148 = scmp.ne.s32.totalorder %s143, %s145
      %p149 = scmp.eq.s32.totalorder %s36, 0
      %p150 = por %p148, %p149
      %p151 = scmp.ne.s32.totalorder %s143, %s145
      %p152 = scmp.eq.s32.totalorder %s41, 1
      %p153 = por %p151, %p152
      %p154 = scmp.ne.s32.totalorder %s145, %s146
      %p155 = scmp.eq.s32.totalorder %s41, 0
      %p156 = por %p154, %p155
      %p157 = scmp.ne.s32.totalorder %s145, %s146
      %p158 = scmp.eq.s32.totalorder %s42, 1
      %p159 = por %p157, %p158
      %p161 = scmp.ne.s32.totalorder %s146, %s160
      %p162 = scmp.eq.s32.totalorder %s42, 0
      %p163 = por %p161, %p162
      %s164 = ssub.s32 %s36, %s43
      %p165 = scmp.eq.s32.totalorder %s164, 0
      %s167 = sadd.s32 %s166, 1
      %s168 = scalar_select %p165, %s166, %s167
      %p171 = pneg %p165
      %p172 = scmp.eq.s32.totalorder %s36, 1
      %p173 = por %p171, %p172
      %p174 = scmp.ne.s32.totalorder %s166, %s169
      %p175 = scmp.eq.s32.totalorder %s36, 0
      %p176 = por %p174, %p175
      %p177 = scmp.ne.s32.totalorder %s166, %s169
      %p178 = scmp.eq.s32.totalorder %s41, 1
      %p179 = por %p177, %p178
      %p180 = scmp.ne.s32.totalorder %s169, %s170
      %p181 = scmp.eq.s32.totalorder %s41, 0
      %p182 = por %p180, %p181
      %p183 = scmp.ne.s32.totalorder %s169, %s170
      %p184 = scmp.eq.s32.totalorder %s42, 1
      %p185 = por %p183, %p184
      %p187 = scmp.ne.s32.totalorder %s170, %s186
      %p188 = scmp.eq.s32.totalorder %s42, 0
      %p189 = por %p187, %p188
      %s190 = ssub.s32 %s36, %s43
      %p191 = scmp.eq.s32.totalorder %s190, 0
      %s193 = sadd.s32 %s192, 1
      %s194 = scalar_select %p191, %s192, %s193
      %p197 = pneg %p191
      %p198 = scmp.eq.s32.totalorder %s36, 1
      %p199 = por %p197, %p198
      %p200 = scmp.ne.s32.totalorder %s192, %s195
      %p201 = scmp.eq.s32.totalorder %s36, 0
      %p202 = por %p200, %p201
      %p203 = scmp.ne.s32.totalorder %s192, %s195
      %p204 = scmp.eq.s32.totalorder %s41, 1
      %p205 = por %p203, %p204
      %p206 = scmp.ne.s32.totalorder %s195, %s196
      %p207 = scmp.eq.s32.totalorder %s41, 0
      %p208 = por %p206, %p207
      %p209 = scmp.ne.s32.totalorder %s195, %s196
      %p210 = scmp.eq.s32.totalorder %s42, 1
      %p211 = por %p209, %p210
      %p213 = scmp.ne.s32.totalorder %s196, %s212
      %p214 = scmp.eq.s32.totalorder %s42, 0
      %p215 = por %p213, %p214
      %p216 = scmp.le.s32.totalorder 1, %s36
      %p217 = scmp.lt.s32.totalorder %s36, 3
      %p218 = pnand %p216, %p217
      %p219 = pneg %p218
      // Predicated region
      $region9: #{tpu_custom_call.1} parent=5 // pred_check
        _
      $region10: #{tpu_custom_call.1} parent=5 // pred_check_branch
        %221 = sbr.rel (%p218) target = $region12
      $region11: #{tpu_custom_call.1} parent=5 // pred_region
        %s222 = ssub.s32 %s36, 1
        // Predicated region
        $region13: #{tpu_custom_call.1} parent=11 // pred_check
          %p223 = pneg %p135
        $region14: #{tpu_custom_call.1} parent=11 // pred_check_branch
          %225 = sbr.rel (%p223) target = $region16
        $region15: #{tpu_custom_call.1} parent=11 // pred_region
          _
        $region16: #{tpu_custom_call.1} parent=11 // pred_fallthru
          _
        // Predicated region
        $region17: #{tpu_custom_call.1} parent=11 // pred_check
          %p226 = pneg %p156
        $region18: #{tpu_custom_call.1} parent=11 // pred_check_branch
          %228 = sbr.rel (%p226) target = $region20
        $region19: #{tpu_custom_call.1} parent=11 // pred_region
          _
        $region20: #{tpu_custom_call.1} parent=11 // pred_fallthru
          _
      $region12: #{tpu_custom_call.1} parent=5 // pred_fallthru
        _
      %p229 = scmp.lt.s32.totalorder %s36, 2
      // Predicated region
      $region21: #{tpu_custom_call.1} parent=5 // pred_check
        %p230 = pneg %p229
      $region22: #{tpu_custom_call.1} parent=5 // pred_check_branch
        %232 = sbr.rel (%p230) target = $region24
      $region23: #{tpu_custom_call.1} parent=5 // pred_region
        // Predicated region
        $region25: #{tpu_custom_call.1} parent=23 // pred_check
          %p233 = pneg %p56
        $region26: #{tpu_custom_call.1} parent=23 // pred_check_branch
          %235 = sbr.rel (%p233) target = $region28
        $region27: #{tpu_custom_call.1} parent=23 // pred_region
          %s236 = smul.u32 2, %s36
          %p237 = scmp.lt.s32.totalorder %s236, 3
          %s238 = scalar_select %p237, %s236, 3
          %s239 = smul.addr %s238, 2
          %s240 = smul.addr %s239, 4
          %s241 = scalar_lea.vmem %s3, %s240
          %s242 = smul.u32 2, %s36
        $region28: #{tpu_custom_call.1} parent=23 // pred_fallthru
          _
        // Predicated region
        $region29: #{tpu_custom_call.1} parent=23 // pred_check
          %p243 = pneg %p82
        $region30: #{tpu_custom_call.1} parent=23 // pred_check_branch
          %245 = sbr.rel (%p243) target = $region32
        $region31: #{tpu_custom_call.1} parent=23 // pred_region
          %s246 = smul.u32 2, %s36
          %p247 = scmp.lt.s32.totalorder %s246, 3
          %s248 = scalar_select %p247, %s246, 3
          %s249 = smul.addr %s248, 2
          %s250 = smul.addr %s249, 4
          %s251 = scalar_lea.vmem %s4, %s250
          %s252 = smul.u32 2, %s36
        $region32: #{tpu_custom_call.1} parent=23 // pred_fallthru
          _
        // Predicated region
        $region33: #{tpu_custom_call.1} parent=23 // pred_check
          %p253 = pneg %p108
        $region34: #{tpu_custom_call.1} parent=23 // pred_check_branch
          %255 = sbr.rel (%p253) target = $region36
        $region35: #{tpu_custom_call.1} parent=23 // pred_region
          %s256 = smul.u32 2, %s36
          %p257 = scmp.lt.s32.totalorder %s256, 3
          %s258 = scalar_select %p257, %s256, 3
          %s259 = smul.addr %s258, 4
          %s260 = smul.addr %s259, 8
          %s261 = scalar_lea.vmem %s5, %s260
          %s262 = smul.u32 2, %s36
        $region36: #{tpu_custom_call.1} parent=23 // pred_fallthru
          _
      $region24: #{tpu_custom_call.1} parent=5 // pred_fallthru
        _
      %p263 = scmp.le.s32.totalorder 1, %s36
      %p264 = scmp.lt.s32.totalorder %s36, 3
      %p265 = pnand %p263, %p264
      %p266 = pneg %p265
      // Predicated region
      $region37: #{tpu_custom_call.1} parent=5 // pred_check
        _
      $region38: #{tpu_custom_call.1} parent=5 // pred_check_branch
        %268 = sbr.rel (%p265) target = $region40
      $region39: #{tpu_custom_call.1} parent=5 // pred_region
        %s269 = ssub.s32 %s36, 1
        %s270 = smul.u32 2, %s41
        %p271 = scmp.lt.s32.totalorder %s270, 3
        %s272 = scalar_select %p271, %s270, 3
        %s273 = smul.addr %s272, 2
        %s274 = smul.addr %s273, 4
        %s275 = scalar_lea.vmem %s3, %s274
        %p276 = pneg %p62
        %p277 = pneg %p59
        %s278 = smul.u32 2, %s41
        %p279 = scmp.lt.s32.totalorder %s278, 3
        %s280 = scalar_select %p279, %s278, 3
        %s281 = smul.addr %s280, 2
        %s282 = smul.addr %s281, 4
        %s283 = scalar_lea.vmem %s4, %s282
        %p284 = pneg %p88
        %p285 = pneg %p85
        %s286 = smul.u32 2, %s41
        %p287 = scmp.lt.s32.totalorder %s286, 3
        %s288 = scalar_select %p287, %s286, 3
        %s289 = smul.addr %s288, 4
        %s290 = smul.addr %s289, 8
        %s291 = scalar_lea.vmem %s5, %s290
        %p292 = pneg %p114
        %p293 = pneg %p111
        %p294 = pneg %p135
        %p295 = pneg %p132
        %p296 = pneg %p156
        %p297 = pneg %p153
        %p298 = pneg %p182
        %p299 = pneg %p179
        %s300 = sand.u32 %s169, 1
        %s301 = scalar_lea.sflag [#allocation7], %s300
        %s302 = sand.u32 %s169, 1
        %s303 = smul.addr %s302, 16
        %s304 = scalar_lea.vmem [#allocation6], %s303
        %p305 = pneg %p208
        %p306 = pneg %p205
        %s307 = sand.u32 %s195, 1
        %s308 = scalar_lea.sflag [#allocation9], %s307
        %s309 = sand.u32 %s195, 1
        %s310 = smul.addr %s309, 16
        %s311 = scalar_lea.vmem [#allocation8], %s310
        %s312 = smul.u32 2, %s41
        %p313 = scmp.lt.s32.totalorder %s312, 3
        %s314 = scalar_select %p313, %s312, 3
        %s315 = smul.addr %s314, 2
        %s316 = smul.addr %s315, 4
        %s317 = scalar_lea.vmem %s3, %s316
        %s318 = smul.u32 2, %s41
        %s319 = smul.u32 2, %s41
        %p320 = scmp.lt.s32.totalorder %s319, 3
        %s321 = scalar_select %p320, %s319, 3
        %s322 = smul.addr %s321, 2
        %s323 = smul.addr %s322, 4
        %s324 = scalar_lea.vmem %s4, %s323
        %s325 = smul.u32 2, %s41
        %s326 = smul.u32 2, %s41
        %p327 = scmp.lt.s32.totalorder %s326, 3
        %s328 = scalar_select %p327, %s326, 3
        %s329 = smul.addr %s328, 4
        %s330 = smul.addr %s329, 8
        %s331 = scalar_lea.vmem %s5, %s330
        %s332 = smul.u32 2, %s41
        %s333 = smul.u32 2, %s41
        %s334 = smul.u32 2, %s41
        %v335 = vlaneseq
        %v336 = vand.u32 %v335, 127
        %v337 = vadd.s32 %v336, 128
        %v338 = vand.u32 %v336, 15
        %v339 = vand.u32 %v337, 15
        %s340 = smul.u32 %s41, 2
        %v341 = vld [vmem:[%s6] sm:$0xff]
        %v342 = vld [vmem:[%s6 + $0x8] sm:$0xff]
        %v343 = vld [vmem:[%s6 + $0x10] sm:$0xff]
        %v344 = vld [vmem:[%s6 + $0x18] sm:$0xff]
        %v345 = vld [vmem:[%s7] sm:$0xf]
        %v346 = vld [vmem:[%s317] sm:$0xff]
        %v347 = vld [vmem:[%s331] sm:$0xff]
        %v348 = vld [vmem:[%s331 + $0x8] sm:$0xff]
        %v349 = vld [vmem:[%s331 + $0x10] sm:$0xff]
        %v350 = vld [vmem:[%s331 + $0x18] sm:$0xff]
        %352 = vset.pattern.permute.xlu0 0
        %353 = vperm.xlu0 %352, %v347
        %v354 = vpop.permute.xlu0 %353
        %357 = vset.pattern.permute.xlu0 0
        %358 = vperm.xlu0 %357, %v348
        %v359 = vpop.permute.xlu0 %358
        %362 = vset.pattern.permute.xlu0 0
        %363 = vperm.xlu0 %362, %v349
        %v364 = vpop.permute.xlu0 %363
        %367 = vset.pattern.permute.xlu0 0
        %368 = vperm.xlu0 %367, %v350
        %v369 = vpop.permute.xlu0 %368
        %v372 = vcombine.high %v346, %v346
        %vm373 = vcmask 31744
        %v375 = vsel %vm373, %v341, 0
        %v378 = vsel %vm373, %v342, 0
        %v381 = vsel %vm373, %v343, 0
        %v384 = vsel %vm373, %v344, 0
        %vm386 = vcmask 1043456
        %v387 = vsel %vm386, %v346, 0
        %v389 = vsel %vm386, %v372, 0
        %391 = vmatprep.subr.mxu0 %v389
        %392 = vmatpush1.msra.mxu0 %v387
        %393 = vmatprep.subr.mxu0 0.0
        %394 = vmatpush1.msra.mxu0 0.0
        %395 = vmatprep.subr.mxu0 0.0
        %396 = vmatpush1.msra.mxu0 0.0
        %397 = vmatprep.subr.mxu0 0.0
        %398 = vmatpush1.msra.mxu0 0.0
        %399 = vmatprep.subr.mxu0 0.0
        %400 = vmatpush1.msra.mxu0 0.0
        %401 = vmatprep.subr.mxu0 0.0
        %402 = vmatpush1.msra.mxu0 0.0
        %403 = vmatprep.subr.mxu0 0.0
        %404 = vmatpush1.msra.mxu0 0.0
        %405 = vmatprep.subr.mxu0 0.0
        %406 = vmatpush1.msra.mxu0 0.0
        %407 = vmatprep.subr.mxu0 0.0
        %408 = vmatpush1.msra.mxu0 0.0
        %409 = vmatprep.subr.mxu0 0.0
        %410 = vmatpush1.msra.mxu0 0.0
        %411 = vmatprep.subr.mxu0 0.0
        %412 = vmatpush1.msra.mxu0 0.0
        %413 = vmatprep.subr.mxu0 0.0
        %414 = vmatpush1.msra.mxu0 0.0
        %415 = vmatprep.subr.mxu0 0.0
        %416 = vmatpush1.msra.mxu0 0.0
        %417 = vmatprep.subr.mxu0 0.0
        %418 = vmatpush1.msra.mxu0 0.0
        %419 = vmatprep.subr.mxu0 0.0
        %420 = vmatpush1.msra.mxu0 0.0
        %421 = vmatprep.subr.mxu0 0.0
        %422 = vmatpush1.msra.mxu0 0.0
        %423 = vmatprep.subr.mxu0 0.0
        %424 = vmatpush1.msra.mxu0 0.0
        %425 = vmatprep.subr.mxu0 0.0
        %426 = vmatpush1.msra.mxu0 0.0
        %427 = vmatprep.subr.mxu0 0.0
        %428 = vmatpush1.msra.mxu0 0.0
        %429 = vmatprep.subr.mxu0 0.0
        %430 = vmatpush1.msra.mxu0 0.0
        %431 = vmatprep.subr.mxu0 0.0
        %432 = vmatpush1.msra.mxu0 0.0
        %433 = vmatprep.subr.mxu0 0.0
        %434 = vmatpush1.msra.mxu0 0.0
        %435 = vmatprep.subr.mxu0 0.0
        %436 = vmatpush1.msra.mxu0 0.0
        %437 = vmatprep.subr.mxu0 0.0
        %438 = vmatpush1.msra.mxu0 0.0
        %439 = vmatprep.subr.mxu0 0.0
        %440 = vmatpush1.msra.mxu0 0.0
        %441 = vmatprep.subr.mxu0 0.0
        %442 = vmatpush1.msra.mxu0 0.0
        %443 = vmatprep.subr.mxu0 0.0
        %444 = vmatpush1.msra.mxu0 0.0
        %445 = vmatprep.subr.mxu0 0.0
        %446 = vmatpush1.msra.mxu0 0.0
        %447 = vmatprep.subr.mxu0 0.0
        %448 = vmatpush1.msra.mxu0 0.0
        %449 = vmatprep.subr.mxu0 0.0
        %450 = vmatpush1.msra.mxu0 0.0
        %451 = vmatprep.subr.mxu0 0.0
        %452 = vmatpush1.msra.mxu0 0.0
        %453 = vmatprep.subr.mxu0 0.0
        %454 = vmatpush1.msra.mxu0 0.0
        %455 = vmatprep.mubr.f32.mxu0 0.0
        %456 = vmatmul.mubr.f32.gmra.mrb[0].mxu0 %v375
        %v457 = vpop.f32.mrb[0].mxu0
        %v458 = vadd.f32 %v354, %v457
        %v459 = vpop.f32.mrb[0].mxu0
        %v460 = vadd.f32 %v354, %v459
        %461 = vmatprep.mubr.f32.mxu0 0.0
        %462 = vmatmul.mubr.f32.gmra.mrb[0].mxu0 %v378
        %v463 = vpop.f32.mrb[0].mxu0
        %v464 = vadd.f32 %v359, %v463
        %v465 = vpop.f32.mrb[0].mxu0
        %v466 = vadd.f32 %v359, %v465
        %467 = vmatprep.mubr.f32.mxu0 0.0
        %468 = vmatmul.mubr.f32.gmra.mrb[0].mxu0 %v381
        %v469 = vpop.f32.mrb[0].mxu0
        %v470 = vadd.f32 %v364, %v469
        %v471 = vpop.f32.mrb[0].mxu0
        %v472 = vadd.f32 %v364, %v471
        %473 = vmatprep.mubr.f32.mxu0 0.0
        %474 = vmatmul.mubr.f32.gmra.mrb[0].mxu0 %v384
        %v475 = vpop.f32.mrb[0].mxu0
        %v476 = vadd.f32 %v369, %v475
        %v477 = vpop.f32.mrb[0].mxu0
        %v478 = vadd.f32 %v369, %v477
        %479 = vdwg.mxu0
        %v480 = vtanh.pop %v458
        %v481 = vtanh.pop %v460
        %v482 = vtanh.pop %v464
        %v483 = vtanh.pop %v466
        %v484 = vtanh.pop %v470
        %v485 = vtanh.pop %v472
        %v486 = vtanh.pop %v476
        %v487 = vtanh.pop %v478
        %vm488 = vcmask 261120
        %v490 = vsel %vm488, %v345, 0
        %492 = vmatprep.subr.mxu0 %v481
        %493 = vmatpush1.msra.mxu0 %v480
        %494 = vmatprep.subr.mxu0 %v483
        %495 = vmatpush1.msra.mxu0 %v482
        %496 = vmatprep.subr.mxu0 %v485
        %497 = vmatpush1.msra.mxu0 %v484
        %498 = vmatprep.subr.mxu0 %v487
        %499 = vmatpush1.msra.mxu0 %v486
        %500 = vmatprep.subr.mxu0 0.0
        %501 = vmatpush1.msra.mxu0 0.0
        %502 = vmatprep.subr.mxu0 0.0
        %503 = vmatpush1.msra.mxu0 0.0
        %504 = vmatprep.subr.mxu0 0.0
        %505 = vmatpush1.msra.mxu0 0.0
        %506 = vmatprep.subr.mxu0 0.0
        %507 = vmatpush1.msra.mxu0 0.0
        %508 = vmatprep.subr.mxu0 0.0
        %509 = vmatpush1.msra.mxu0 0.0
        %510 = vmatprep.subr.mxu0 0.0
        %511 = vmatpush1.msra.mxu0 0.0
        %512 = vmatprep.subr.mxu0 0.0
        %513 = vmatpush1.msra.mxu0 0.0
        %514 = vmatprep.subr.mxu0 0.0
        %515 = vmatpush1.msra.mxu0 0.0
        %516 = vmatprep.subr.mxu0 0.0
        %517 = vmatpush1.msra.mxu0 0.0
        %518 = vmatprep.subr.mxu0 0.0
        %519 = vmatpush1.msra.mxu0 0.0
        %520 = vmatprep.subr.mxu0 0.0
        %521 = vmatpush1.msra.mxu0 0.0
        %522 = vmatprep.subr.mxu0 0.0
        %523 = vmatpush1.msra.mxu0 0.0
        %524 = vmatprep.subr.mxu0 0.0
        %525 = vmatpush1.msra.mxu0 0.0
        %526 = vmatprep.subr.mxu0 0.0
        %527 = vmatpush1.msra.mxu0 0.0
        %528 = vmatprep.subr.mxu0 0.0
        %529 = vmatpush1.msra.mxu0 0.0
        %530 = vmatprep.subr.mxu0 0.0
        %531 = vmatpush1.msra.mxu0 0.0
        %532 = vmatprep.subr.mxu0 0.0
        %533 = vmatpush1.msra.mxu0 0.0
        %534 = vmatprep.subr.mxu0 0.0
        %535 = vmatpush1.msra.mxu0 0.0
        %536 = vmatprep.subr.mxu0 0.0
        %537 = vmatpush1.msra.mxu0 0.0
        %538 = vmatprep.subr.mxu0 0.0
        %539 = vmatpush1.msra.mxu0 0.0
        %540 = vmatprep.subr.mxu0 0.0
        %541 = vmatpush1.msra.mxu0 0.0
        %542 = vmatprep.subr.mxu0 0.0
        %543 = vmatpush1.msra.mxu0 0.0
        %544 = vmatprep.subr.mxu0 0.0
        %545 = vmatpush1.msra.mxu0 0.0
        %546 = vmatprep.subr.mxu0 0.0
        %547 = vmatpush1.msra.mxu0 0.0
        %548 = vmatprep.subr.mxu0 0.0
        %549 = vmatpush1.msra.mxu0 0.0
        %550 = vmatprep.subr.mxu0 0.0
        %551 = vmatpush1.msra.mxu0 0.0
        %552 = vmatprep.subr.mxu0 0.0
        %553 = vmatpush1.msra.mxu0 0.0
        %554 = vmatprep.subr.mxu0 0.0
        %555 = vmatpush1.msra.mxu0 0.0
        %556 = vmatprep.mubr.f32.mxu0 0.0
        %557 = vmatmul.mubr.f32.gmra.mrb[0].mxu0 %v490
        %v558 = vpop.f32.mrb[0].mxu0
        %v559 = vadd.f32 0.0, %v558
        %v560 = vpop.f32.mrb[0].mxu0
        %v561 = vadd.f32 0.0, %v560
        %562 = vdwg.mxu0
        %s563 = sld [smem:[#allocation3 + %s340]]
        %v564 = vstv %s563
        %vm565 = vcmp.lt.s32.totalorder %v338, %v564
        %vm566 = vcmp.lt.s32.totalorder %v339, %v564
        %v567 = vsel %vm565, 1, 0
        %v568 = vsel %vm566, 1, 0
        %v569 = vcvt.s32.f32 %v567
        %v570 = vcvt.s32.f32 %v568
        %s571 = sld [smem:[#allocation5 + %s340]]
        %v572 = vstv %s571
        %v573 = vmul.f32 %v572, %v569
        %v574 = vmul.f32 %v572, %v570
        %s575 = sld [smem:[#allocation4 + %s340]]
        %v576 = vstv %s575
        %v577 = vmul.f32 %v576, %v569
        %v578 = vmul.f32 %v576, %v570
        %v579 = vmul.f32 %v573, %v559
        %v580 = vmul.f32 %v574, %v561
        %v583 = vcombine.low %v579, %v580
        %v585 = vadd.f32 %v346, %v583
        %v586 = vld [vmem:[%s324] sm:$0xff]
        %v588 = vcombine.high %v586, %v586
        %v590 = vmul.f32 %v577, %v586
        %v591 = vmul.f32 %v578, %v588
        %v594 = vcombine.low %v590, %v591
        %v596 = vadd.f32 %v585, %v594
        %597 = vst [vmem:[%s304] sm:$0xff] %v596
        %598 = vst [vmem:[%s311] sm:$0xff] %v585
        %s599 = sadd.s32 %s340, 1
        %s600 = scalar_lea.vmem %s317, 8
        %v601 = vld [vmem:[%s600] sm:$0xff]
        %s602 = scalar_lea.vmem %s331, 32
        %v603 = vld [vmem:[%s602] sm:$0xff]
        %v604 = vld [vmem:[%s602 + $0x8] sm:$0xff]
        %v605 = vld [vmem:[%s602 + $0x10] sm:$0xff]
        %v606 = vld [vmem:[%s602 + $0x18] sm:$0xff]
        %608 = vset.pattern.permute.xlu0 0
        %609 = vperm.xlu0 %608, %v603
        %v610 = vpop.permute.xlu0 %609
        %613 = vset.pattern.permute.xlu0 0
        %614 = vperm.xlu0 %613, %v604
        %v615 = vpop.permute.xlu0 %614
        %618 = vset.pattern.permute.xlu0 0
        %619 = vperm.xlu0 %618, %v605
        %v620 = vpop.permute.xlu0 %619
        %623 = vset.pattern.permute.xlu0 0
        %624 = vperm.xlu0 %623, %v606
        %v625 = vpop.permute.xlu0 %624
        %v628 = vcombine.high %v601, %v601
        %v629 = vsel %vm386, %v601, 0
        %v631 = vsel %vm386, %v628, 0
        %633 = vmatprep.subr.mxu0 %v631
        %634 = vmatpush1.msra.mxu0 %v629
        %635 = vmatprep.subr.mxu0 0.0
        %636 = vmatpush1.msra.mxu0 0.0
        %637 = vmatprep.subr.mxu0 0.0
        %638 = vmatpush1.msra.mxu0 0.0
        %639 = vmatprep.subr.mxu0 0.0
        %640 = vmatpush1.msra.mxu0 0.0
        %641 = vmatprep.subr.mxu0 0.0
        %642 = vmatpush1.msra.mxu0 0.0
        %643 = vmatprep.subr.mxu0 0.0
        %644 = vmatpush1.msra.mxu0 0.0
        %645 = vmatprep.subr.mxu0 0.0
        %646 = vmatpush1.msra.mxu0 0.0
        %647 = vmatprep.subr.mxu0 0.0
        %648 = vmatpush1.msra.mxu0 0.0
        %649 = vmatprep.subr.mxu0 0.0
        %650 = vmatpush1.msra.mxu0 0.0
        %651 = vmatprep.subr.mxu0 0.0
        %652 = vmatpush1.msra.mxu0 0.0
        %653 = vmatprep.subr.mxu0 0.0
        %654 = vmatpush1.msra.mxu0 0.0
        %655 = vmatprep.subr.mxu0 0.0
        %656 = vmatpush1.msra.mxu0 0.0
        %657 = vmatprep.subr.mxu0 0.0
        %658 = vmatpush1.msra.mxu0 0.0
        %659 = vmatprep.subr.mxu0 0.0
        %660 = vmatpush1.msra.mxu0 0.0
        %661 = vmatprep.subr.mxu0 0.0
        %662 = vmatpush1.msra.mxu0 0.0
        %663 = vmatprep.subr.mxu0 0.0
        %664 = vmatpush1.msra.mxu0 0.0
        %665 = vmatprep.subr.mxu0 0.0
        %666 = vmatpush1.msra.mxu0 0.0
        %667 = vmatprep.subr.mxu0 0.0
        %668 = vmatpush1.msra.mxu0 0.0
        %669 = vmatprep.subr.mxu0 0.0
        %670 = vmatpush1.msra.mxu0 0.0
        %671 = vmatprep.subr.mxu0 0.0
        %672 = vmatpush1.msra.mxu0 0.0
        %673 = vmatprep.subr.mxu0 0.0
        %674 = vmatpush1.msra.mxu0 0.0
        %675 = vmatprep.subr.mxu0 0.0
        %676 = vmatpush1.msra.mxu0 0.0
        %677 = vmatprep.subr.mxu0 0.0
        %678 = vmatpush1.msra.mxu0 0.0
        %679 = vmatprep.subr.mxu0 0.0
        %680 = vmatpush1.msra.mxu0 0.0
        %681 = vmatprep.subr.mxu0 0.0
        %682 = vmatpush1.msra.mxu0 0.0
        %683 = vmatprep.subr.mxu0 0.0
        %684 = vmatpush1.msra.mxu0 0.0
        %685 = vmatprep.subr.mxu0 0.0
        %686 = vmatpush1.msra.mxu0 0.0
        %687 = vmatprep.subr.mxu0 0.0
        %688 = vmatpush1.msra.mxu0 0.0
        %689 = vmatprep.subr.mxu0 0.0
        %690 = vmatpush1.msra.mxu0 0.0
        %691 = vmatprep.subr.mxu0 0.0
        %692 = vmatpush1.msra.mxu0 0.0
        %693 = vmatprep.subr.mxu0 0.0
        %694 = vmatpush1.msra.mxu0 0.0
        %695 = vmatprep.subr.mxu0 0.0
        %696 = vmatpush1.msra.mxu0 0.0
        %697 = vmatprep.mubr.f32.mxu0 0.0
        %698 = vmatmul.mubr.f32.gmra.mrb[0].mxu0 %v375
        %v699 = vpop.f32.mrb[0].mxu0
        %v700 = vadd.f32 %v610, %v699
        %v701 = vpop.f32.mrb[0].mxu0
        %v702 = vadd.f32 %v610, %v701
        %703 = vmatprep.mubr.f32.mxu0 0.0
        %704 = vmatmul.mubr.f32.gmra.mrb[0].mxu0 %v378
        %v705 = vpop.f32.mrb[0].mxu0
        %v706 = vadd.f32 %v615, %v705
        %v707 = vpop.f32.mrb[0].mxu0
        %v708 = vadd.f32 %v615, %v707
        %709 = vmatprep.mubr.f32.mxu0 0.0
        %710 = vmatmul.mubr.f32.gmra.mrb[0].mxu0 %v381
        %v711 = vpop.f32.mrb[0].mxu0
        %v712 = vadd.f32 %v620, %v711
        %v713 = vpop.f32.mrb[0].mxu0
        %v714 = vadd.f32 %v620, %v713
        %715 = vmatprep.mubr.f32.mxu0 0.0
        %716 = vmatmul.mubr.f32.gmra.mrb[0].mxu0 %v384
        %v717 = vpop.f32.mrb[0].mxu0
        %v718 = vadd.f32 %v625, %v717
        %v719 = vpop.f32.mrb[0].mxu0
        %v720 = vadd.f32 %v625, %v719
        %721 = vdwg.mxu0
        %v722 = vtanh.pop %v700
        %v723 = vtanh.pop %v702
        %v724 = vtanh.pop %v706
        %v725 = vtanh.pop %v708
        %v726 = vtanh.pop %v712
        %v727 = vtanh.pop %v714
        %v728 = vtanh.pop %v718
        %v729 = vtanh.pop %v720
        %730 = vmatprep.subr.mxu0 %v723
        %731 = vmatpush1.msra.mxu0 %v722
        %732 = vmatprep.subr.mxu0 %v725
        %733 = vmatpush1.msra.mxu0 %v724
        %734 = vmatprep.subr.mxu0 %v727
        %735 = vmatpush1.msra.mxu0 %v726
        %736 = vmatprep.subr.mxu0 %v729
        %737 = vmatpush1.msra.mxu0 %v728
        %738 = vmatprep.subr.mxu0 0.0
        %739 = vmatpush1.msra.mxu0 0.0
        %740 = vmatprep.subr.mxu0 0.0
        %741 = vmatpush1.msra.mxu0 0.0
        %742 = vmatprep.subr.mxu0 0.0
        %743 = vmatpush1.msra.mxu0 0.0
        %744 = vmatprep.subr.mxu0 0.0
        %745 = vmatpush1.msra.mxu0 0.0
        %746 = vmatprep.subr.mxu0 0.0
        %747 = vmatpush1.msra.mxu0 0.0
        %748 = vmatprep.subr.mxu0 0.0
        %749 = vmatpush1.msra.mxu0 0.0
        %750 = vmatprep.subr.mxu0 0.0
        %751 = vmatpush1.msra.mxu0 0.0
        %752 = vmatprep.subr.mxu0 0.0
        %753 = vmatpush1.msra.mxu0 0.0
        %754 = vmatprep.subr.mxu0 0.0
        %755 = vmatpush1.msra.mxu0 0.0
        %756 = vmatprep.subr.mxu0 0.0
        %757 = vmatpush1.msra.mxu0 0.0
        %758 = vmatprep.subr.mxu0 0.0
        %759 = vmatpush1.msra.mxu0 0.0
        %760 = vmatprep.subr.mxu0 0.0
        %761 = vmatpush1.msra.mxu0 0.0
        %762 = vmatprep.subr.mxu0 0.0
        %763 = vmatpush1.msra.mxu0 0.0
        %764 = vmatprep.subr.mxu0 0.0
        %765 = vmatpush1.msra.mxu0 0.0
        %766 = vmatprep.subr.mxu0 0.0
        %767 = vmatpush1.msra.mxu0 0.0
        %768 = vmatprep.subr.mxu0 0.0
        %769 = vmatpush1.msra.mxu0 0.0
        %770 = vmatprep.subr.mxu0 0.0
        %771 = vmatpush1.msra.mxu0 0.0
        %772 = vmatprep.subr.mxu0 0.0
        %773 = vmatpush1.msra.mxu0 0.0
        %774 = vmatprep.subr.mxu0 0.0
        %775 = vmatpush1.msra.mxu0 0.0
        %776 = vmatprep.subr.mxu0 0.0
        %777 = vmatpush1.msra.mxu0 0.0
        %778 = vmatprep.subr.mxu0 0.0
        %779 = vmatpush1.msra.mxu0 0.0
        %780 = vmatprep.subr.mxu0 0.0
        %781 = vmatpush1.msra.mxu0 0.0
        %782 = vmatprep.subr.mxu0 0.0
        %783 = vmatpush1.msra.mxu0 0.0
        %784 = vmatprep.subr.mxu0 0.0
        %785 = vmatpush1.msra.mxu0 0.0
        %786 = vmatprep.subr.mxu0 0.0
        %787 = vmatpush1.msra.mxu0 0.0
        %788 = vmatprep.subr.mxu0 0.0
        %789 = vmatpush1.msra.mxu0 0.0
        %790 = vmatprep.subr.mxu0 0.0
        %791 = vmatpush1.msra.mxu0 0.0
        %792 = vmatprep.subr.mxu0 0.0
        %793 = vmatpush1.msra.mxu0 0.0
        %794 = vmatprep.mubr.f32.mxu0 0.0
        %795 = vmatmul.mubr.f32.gmra.mrb[0].mxu0 %v490
        %v796 = vpop.f32.mrb[0].mxu0
        %v797 = vadd.f32 0.0, %v796
        %v798 = vpop.f32.mrb[0].mxu0
        %v799 = vadd.f32 0.0, %v798
        %800 = vdwg.mxu0
        %s801 = sld [smem:[#allocation3 + %s599]]
        %v802 = vstv %s801
        %vm803 = vcmp.lt.s32.totalorder %v338, %v802
        %vm804 = vcmp.lt.s32.totalorder %v339, %v802
        %v805 = vsel %vm803, 1, 0
        %v806 = vsel %vm804, 1, 0
        %v807 = vcvt.s32.f32 %v805
        %v808 = vcvt.s32.f32 %v806
        %s809 = sld [smem:[#allocation5 + %s599]]
        %v810 = vstv %s809
        %v811 = vmul.f32 %v810, %v807
        %v812 = vmul.f32 %v810, %v808
        %s813 = sld [smem:[#allocation4 + %s599]]
        %v814 = vstv %s813
        %v815 = vmul.f32 %v814, %v807
        %v816 = vmul.f32 %v814, %v808
        %v817 = vmul.f32 %v811, %v797
        %v818 = vmul.f32 %v812, %v799
        %v821 = vcombine.low %v817, %v818
        %v823 = vadd.f32 %v601, %v821
        %s824 = scalar_lea.vmem %s324, 8
        %v825 = vld [vmem:[%s824] sm:$0xff]
        %v827 = vcombine.high %v825, %v825
        %v829 = vmul.f32 %v815, %v825
        %v830 = vmul.f32 %v816, %v827
        %v833 = vcombine.low %v829, %v830
        %v835 = vadd.f32 %v823, %v833
        %s836 = scalar_lea.vmem %s304, 8 [#allocation6]
        %837 = vst [vmem:[%s836] sm:$0xff] %v835
        %s838 = scalar_lea.vmem %s311, 8 [#allocation8]
        %839 = vst [vmem:[%s838] sm:$0xff] %v823
        %s840 = sand.u32 %s169, 1
        %s841 = scalar_lea.sflag [#allocation7], %s840
        %s842 = sand.u32 %s169, 1
        %s843 = smul.addr %s842, 16
        %s844 = scalar_lea.vmem [#allocation6], %s843
        %s845 = sand.u32 %s195, 1
        %s846 = scalar_lea.sflag [#allocation9], %s845
        %s847 = sand.u32 %s195, 1
        %s848 = smul.addr %s847, 16
        %s849 = scalar_lea.vmem [#allocation8], %s848
        // Predicated region
        $region41: #{tpu_custom_call.1} parent=39 // pred_check
          %p850 = pneg %p179
        $region42: #{tpu_custom_call.1} parent=39 // pred_check_branch
          %852 = sbr.rel (%p850) target = $region44
        $region43: #{tpu_custom_call.1} parent=39 // pred_region
          %s853 = smul.u32 2, %s41
          %s855 = ssub.s32 256, 256
          %856 = vsyncadd %s841, %s855
          %s857 = smul.addr %s853, 2
          %s858 = smul.addr %s857, 64
          %s859 = scalar_lea.hbm %s8, %s858
          %s860 = sshll.u32 %s844, 4
          %s861 = int_to_ptr.vmem [resolvable:$true] %s860
          %866 = dma.vmem_to_hbm [thread:$0]  %s861, 256, %s859, %s841, 128, 128, 8
        $region44: #{tpu_custom_call.1} parent=39 // pred_fallthru
          _
        // Predicated region
        $region45: #{tpu_custom_call.1} parent=39 // pred_check
          %p867 = pneg %p205
        $region46: #{tpu_custom_call.1} parent=39 // pred_check_branch
          %869 = sbr.rel (%p867) target = $region48
        $region47: #{tpu_custom_call.1} parent=39 // pred_region
          %s870 = smul.u32 2, %s41
          %s872 = ssub.s32 256, 256
          %873 = vsyncadd %s846, %s872
          %s874 = smul.addr %s870, 2
          %s875 = smul.addr %s874, 64
          %s876 = scalar_lea.hbm %s9, %s875
          %s877 = sshll.u32 %s849, 4
          %s878 = int_to_ptr.vmem [resolvable:$true] %s877
          %883 = dma.vmem_to_hbm [thread:$0]  %s878, 256, %s876, %s846, 128, 128, 8
        $region48: #{tpu_custom_call.1} parent=39 // pred_fallthru
          _
      $region40: #{tpu_custom_call.1} parent=5 // pred_fallthru
        _
      %p884 = scmp.le.s32.totalorder 2, %s36
      // Predicated region
      $region49: #{tpu_custom_call.1} parent=5 // pred_check
        %p885 = pneg %p884
      $region50: #{tpu_custom_call.1} parent=5 // pred_check_branch
        %887 = sbr.rel (%p885) target = $region52
      $region51: #{tpu_custom_call.1} parent=5 // pred_region
        %s888 = ssub.s32 %s36, 2
        // Predicated region
        $region53: #{tpu_custom_call.1} parent=51 // pred_check
          %p889 = pneg %p185
        $region54: #{tpu_custom_call.1} parent=51 // pred_check_branch
          %891 = sbr.rel (%p889) target = $region56
        $region55: #{tpu_custom_call.1} parent=51 // pred_region
          %s892 = sand.u32 %s170, 1
          %s893 = scalar_lea.sflag [#allocation7], %s892
          %s894 = sand.u32 %s170, 1
          %s895 = smul.addr %s894, 16
          %s896 = scalar_lea.vmem [#allocation6], %s895
          %897 = dma.done %s893, 256
        $region56: #{tpu_custom_call.1} parent=51 // pred_fallthru
          _
        // Predicated region
        $region57: #{tpu_custom_call.1} parent=51 // pred_check
          %p898 = pneg %p211
        $region58: #{tpu_custom_call.1} parent=51 // pred_check_branch
          %900 = sbr.rel (%p898) target = $region60
        $region59: #{tpu_custom_call.1} parent=51 // pred_region
          %s901 = sand.u32 %s196, 1
          %s902 = scalar_lea.sflag [#allocation9], %s901
          %s903 = sand.u32 %s196, 1
          %s904 = smul.addr %s903, 16
          %s905 = scalar_lea.vmem [#allocation8], %s904
          %906 = dma.done %s902, 256
        $region60: #{tpu_custom_call.1} parent=51 // pred_fallthru
          _
      $region52: #{tpu_custom_call.1} parent=5 // pred_fallthru
        _
    $region6: #{tpu_custom_call.1} parent=1 // loop_footer
      %s40 = sadd.s32 1, %s36
    $region7: #{tpu_custom_call.1} parent=1 // loop_footer_branch
      %35 = sbr.rel target = $region3
    $region8: #{tpu_custom_call.1} parent=1 // loop_exit
      _
    %907 = vsyncpa [#allocation7], 1
    %s908 = scalar_lea.sflag [#allocation7], 1
    %909 = vsyncpa %s908, 1
    %910 = vsyncpa [#allocation9], 1
    %s911 = scalar_lea.sflag [#allocation9], 1
    %912 = vsyncpa %s911, 1

</llo_original>
